<compile_context>
chip_gen: v5e
topology: v5e:2x2
jax: 0.10.0
libtpu: 0.0.40
codegen_flags: <defaults>
</compile_context>

<pallas_src>
import jax
import jax.numpy as jnp
from jax.experimental import pallas as pl
from jax.experimental.pallas import tpu as pltpu


def _overlap_kernel(xr_ref, xat2_ref, rcol_ref, sqcol_ref, invr2_ref,
                    rrowm_ref, sqrow_ref, inva_ref, inv_ref, out_ref):
    """One (TM, Np) row-block of where(invalids, relu(overlap), -inf), stored bf16.

    xr_ref:    (TM, D)  row block of concepts
    xat2_ref:  (D, Np)  2 * concept^T (MXU RHS; the cross-term factor 2 folded in)
    rcol_ref:  (TM, 1)  radii of the row block
    sqcol_ref: (TM, 1)  squared norms of the row block
    invr2_ref: (TM, 1)  2 / max(1 - |x_i|^2, 1e-6)   (precomputed, exact)
    rrowm_ref: (1, Np)  radius + margin for all concepts
    sqrow_ref: (1, Np)  squared norms of all concepts
    inva_ref:  (1, Np)  1 / max(1 - |x_j|^2, 1e-6)   (precomputed, exact)
    inv_ref:   (TM, Np) int8 mask: nonzero where the pair is selected (invalids)
    out_ref:   (TM, Np) bf16 output block
    """
    # Cross term on the MXU; RHS pre-scaled by 2, so cross2 = 2 * x_i . x_j.
    cross2 = jnp.dot(xr_ref[...], xat2_ref[...],
                     preferred_element_type=jnp.float32)             # (TM, Np)
    # |x|^2 + |y|^2 - 2 x.y, clamped at 0 (cancellation for near-duplicate pairs).
    sq = jnp.maximum(sqcol_ref[...] + sqrow_ref[...] - cross2, 0.0)  # (TM, Np)
    # w = z - 1 = 2*|x-y|^2 / ((1-|x|^2)(1-|y|^2)) >= 0
    w = sq * invr2_ref[...] * inva_ref[...]
    # arccosh(1 + w) = log(1 + w + sqrt(w*(w+2)))   (stable near w = 0)
    dist = jnp.log(1.0 + (w + jnp.sqrt(w * (w + 2.0))))
    # overlap = margin + r_i + r_j - dist   (margin folded into rrowm)
    overlap = rcol_ref[...] + rrowm_ref[...] - dist
    relu = jnp.maximum(overlap, 0.0)
    out_ref[...] = jnp.where(inv_ref[...] != 0, relu, -jnp.inf).astype(out_ref.dtype)


def _round_up(x, m):
    return ((x + m - 1) // m) * m


def _vmem_capacity_bytes():
    """Physical per-core VMEM; conservative fallback if the query is unavailable."""
    try:
        return int(pltpu.get_tpu_info().vmem_capacity_bytes)
    except Exception:
        return 64 * 1024 * 1024


def _step_vmem_bytes(tm, n, d):
    """Conservative double-buffered per-step VMEM footprint (bytes)."""
    return 2 * (tm * d * 4          # concept row block (f32)
                + d * n * 4         # 2*concept^T (f32, resident)
                + 3 * tm * 4        # radius / sqnorm / recip column vectors
                + 3 * n * 4         # radius+margin / sqnorm / recip row vectors
                + tm * n * 1        # int8 mask block
                + tm * n * 2)       # bf16 output block


def _pick_tm(n_pad, d, vmem_cap):
    """Largest tm (multiple of 32, <= 512) dividing n_pad that fits the
    generation-aware VMEM budget.  On 64-MiB-VMEM parts (v7x): >= 2 grid steps,
    prefer an even step count (megacore balance), ~40 MiB budget.  On 128-MiB
    parts (v5e/v6e, single TC): no step floor, ~96 MiB budget."""
    small_vmem = vmem_cap <= (64 << 20) + (1 << 20)
    budget = (40 << 20) if small_vmem else (96 << 20)
    min_steps = 2 if small_vmem else 1
    cands = []
    for tm in range(32, min(n_pad, 512) + 1, 32):
        if n_pad % tm:
            continue
        if n_pad // tm < min_steps:
            continue
        if _step_vmem_bytes(tm, n_pad, d) > budget:
            continue
        cands.append(tm)
    if not cands:
        return 32
    if small_vmem:
        even = [t for t in cands if (n_pad // t) % 2 == 0]
        if even:
            return max(even)
    return max(cands)


def prepare_invalids(invalids, n_pad=None):
    """One-time mask preparation (mirrors OverlapLoss.__init__): (N, N) bool ->
    (Np, Np) int8, padded entries 0 (never selected).  Do this once outside the
    training step so the per-call hot path has no extra N^2 astype/pad passes."""
    n = invalids.shape[0]
    if n_pad is None:
        n_pad = _round_up(n, 128)
    inv = invalids.astype(jnp.int8)
    if n_pad != n:
        inv = jnp.pad(inv, ((0, n_pad - n), (0, n_pad - n)))
    return inv


def overlap_loss(concept, radius, invalids, *, margin=0.5, n_samples=256, tm=None):
    """Pallas-backed OverlapLoss.forward.

    concept:  (N, D) float32, points in the Poincare ball (|x| < 1)
    radius:   (N,)   float32
    invalids: preferably the (Np, Np) int8 mask from prepare_invalids() (done
              once, like the PyTorch module storing it in __init__); a raw
              (N, N) bool mask is also accepted and converted on the fly.
    """
    N, D = concept.shape
    concept = concept.astype(jnp.float32)
    radius = radius.astype(jnp.float32)

    # Pad N up to a multiple of 128: lane-dense (unmasked) bf16/int8 tiles.
    Np = _round_up(N, 128)
    pad = Np - N
    if pad:
        concept = jnp.pad(concept, ((0, pad), (0, 0)))
        radius = jnp.pad(radius, ((0, pad),))

    if invalids.shape != (Np, Np) or invalids.dtype != jnp.int8:
        invalids = prepare_invalids(invalids, Np)   # fallback: extra N^2 pass

    vmem_cap = _vmem_capacity_bytes()
    if tm is None:
        tm = _pick_tm(Np, D, vmem_cap)
    assert Np % tm == 0 and tm % 32 == 0, (Np, tm)

    # Tiny O(N*D)/O(N) wrapper-side precomputation; all N^2 work is in-kernel.
    concept_t2 = (2.0 * concept).T                          # (D, Np) MXU RHS
    sq = jnp.sum(concept * concept, axis=-1)                # (Np,)
    denom = jnp.maximum(1.0 - sq, 1e-6)
    r_col = radius.reshape(Np, 1)
    sq_col = sq.reshape(Np, 1)
    invr2_col = (2.0 / denom).reshape(Np, 1)
    r_row_m = (radius + margin).reshape(1, Np)
    sq_row = sq.reshape(1, Np)
    inva_row = (1.0 / denom).reshape(1, Np)

    step_bytes = _step_vmem_bytes(tm, Np, D)
    limit_cap = (56 << 20) if vmem_cap <= (64 << 20) + (1 << 20) \
        else min(vmem_cap, 100 << 20)
    vmem_limit = int(min(max(step_bytes + (4 << 20), 32 << 20), limit_cap))

    masked = pl.pallas_call(
        _overlap_kernel,
        out_shape=jax.ShapeDtypeStruct((Np, Np), jnp.bfloat16),
        grid=(Np // tm,),
        in_specs=[
            pl.BlockSpec((tm, D), lambda i: (i, 0)),    # concept row block
            pl.BlockSpec((D, Np), lambda i: (0, 0)),    # 2*concept^T (resident)
            pl.BlockSpec((tm, 1), lambda i: (i, 0)),    # radius column block
            pl.BlockSpec((tm, 1), lambda i: (i, 0)),    # sq-norm column block
            pl.BlockSpec((tm, 1), lambda i: (i, 0)),    # 2/(1-|x|^2) column block
            pl.BlockSpec((1, Np), lambda i: (0, 0)),    # radius+margin row vector
            pl.BlockSpec((1, Np), lambda i: (0, 0)),    # sq-norm row vector
            pl.BlockSpec((1, Np), lambda i: (0, 0)),    # 1/(1-|y|^2) row vector
            pl.BlockSpec((tm, Np), lambda i: (i, 0)),   # int8 invalids mask rows
        ],
        out_specs=pl.BlockSpec((tm, Np), lambda i: (i, 0)),
        compiler_params=pltpu.CompilerParams(
            dimension_semantics=("parallel",),
            vmem_limit_bytes=vmem_limit),
        cost_estimate=pl.CostEstimate(
            flops=2 * Np * Np * D + 15 * Np * Np,
            transcendentals=2 * Np * Np,
            bytes_accessed=Np * Np * (1 + 2) + 2 * Np * D * 4 + 8 * Np * 4),
    )(concept, concept_t2, r_col, sq_col, invr2_col,
      r_row_m, sq_row, inva_row, invalids)

    # Two-stage exact top-k: any global top-n entry is within its row's top-n,
    # so per-row top_k (k = min(n_samples, Np)) followed by a top_k over the
    # candidate slab equals a flat top_k over all Np^2 entries, without sorting
    # an N^2 contiguous buffer.
    # TODO(synk): no TPU Pallas sort/selection primitive -> lax.top_k glue.
    k1 = min(n_samples, Np)
    row_top, _ = jax.lax.top_k(masked, k1)                  # (Np, k1) bf16
    cand = row_top.astype(jnp.float32).reshape(-1)
    topk_vals, _ = jax.lax.top_k(cand, n_samples)
    return jnp.mean(topk_vals)


def _reference_loss(concept, radius, invalids, margin, n_samples):
    """Pure-JAX reference matching the PyTorch forward (with Poincare distance)."""
    sq = jnp.sum((concept[:, None, :] - concept[None, :, :]) ** 2, axis=-1)
    norms = jnp.sum(concept * concept, axis=-1)
    denom = jnp.maximum((1.0 - norms[:, None]) * (1.0 - norms[None, :]), 1e-12)
    z = jnp.maximum(1.0 + 2.0 * sq / denom, 1.0)
    dist = jnp.arccosh(z)
    overlap = margin + radius[None, :] + radius[:, None] - dist
    vals = jnp.where(invalids, jnp.maximum(overlap, 0.0), -jnp.inf).reshape(-1)
    topk_vals, _ = jax.lax.top_k(vals, n_samples)
    return jnp.mean(topk_vals)


if __name__ == "__main__":
    N, D = 64, 16
    margin = 0.5
    n_samples = 256

    key = jax.random.PRNGKey(0)
    k_c, k_r, k_m = jax.random.split(key, 3)

    # Concepts inside the Poincare ball (norm scaled to <= ~0.8).
    raw = jax.random.normal(k_c, (N, D), dtype=jnp.float32)
    raw_norm = jnp.linalg.norm(raw, axis=-1, keepdims=True)
    scale = jax.random.uniform(k_c, (N, 1), minval=0.1, maxval=0.8)
    concept = raw / (raw_norm + 1e-6) * scale

    radius = jax.random.uniform(k_r, (N,), minval=0.05, maxval=0.3, dtype=jnp.float32)

    # invalids[i, j] True => pair (i, j) should NOT overlap (participates in the loss).
    invalids = jax.random.bernoulli(k_m, p=0.5, shape=(N, N))
    invalids = jnp.logical_and(invalids, ~jnp.eye(N, dtype=bool))
    assert int(jnp.sum(invalids)) >= n_samples  # torch.topk would require this too

    # One-time mask preparation (mirrors OverlapLoss.__init__ storing invalids).
    inv_prepared = prepare_invalids(invalids)

    loss = overlap_loss(concept, radius, inv_prepared,
                        margin=margin, n_samples=n_samples)
    loss = jax.block_until_ready(loss)

    ref = jax.block_until_ready(
        _reference_loss(concept, radius, invalids, margin, n_samples))
    assert jnp.isfinite(loss)
    # Tolerance covers the bf16 output rounding (~0.4%/element, averaged by the
    # n_samples-way mean); reciprocals are now exact (computed in the wrapper).
    assert jnp.allclose(loss, ref, rtol=1e-2, atol=1e-2), (loss, ref)

    print("KERNEL_OK")
</pallas_src>

<mosaic_0001>
module attributes {stable_mosaic.version = 11 : i64} {
  func.func @_overlap_kernel(%arg0: i32, %arg1: memref<64x16xf32, #tpu.memory_space<vmem>>, %arg2: memref<16x128xf32, #tpu.memory_space<vmem>>, %arg3: memref<64x1xf32, #tpu.memory_space<vmem>>, %arg4: memref<64x1xf32, #tpu.memory_space<vmem>>, %arg5: memref<64x1xf32, #tpu.memory_space<vmem>>, %arg6: memref<1x128xf32, #tpu.memory_space<vmem>>, %arg7: memref<1x128xf32, #tpu.memory_space<vmem>>, %arg8: memref<1x128xf32, #tpu.memory_space<vmem>>, %arg9: memref<64x128xi8, #tpu.memory_space<vmem>>, %arg10: memref<64x128xbf16, #tpu.memory_space<vmem>>) attributes {dimension_semantics = [#tpu.dimension_semantics<parallel>], iteration_bounds = array<i64: 2>, scalar_prefetch = 0 : i64, scratch_operands = 0 : i64, tpu.core_type = #tpu.core_type<tc>, window_params = [{transform_indices = @transform_0, window_bounds = array<i64: 64, 16>}, {pipeline_mode = #tpu.pipeline_mode<synchronous>, transform_indices = @transform_1, window_bounds = array<i64: 16, 128>}, {transform_indices = @transform_2, window_bounds = array<i64: 64, 1>}, {transform_indices = @transform_3, window_bounds = array<i64: 64, 1>}, {transform_indices = @transform_4, window_bounds = array<i64: 64, 1>}, {pipeline_mode = #tpu.pipeline_mode<synchronous>, transform_indices = @transform_5, window_bounds = array<i64: 1, 128>}, {pipeline_mode = #tpu.pipeline_mode<synchronous>, transform_indices = @transform_6, window_bounds = array<i64: 1, 128>}, {pipeline_mode = #tpu.pipeline_mode<synchronous>, transform_indices = @transform_7, window_bounds = array<i64: 1, 128>}, {transform_indices = @transform_8, window_bounds = array<i64: 64, 128>}, {transform_indices = @transform_9, window_bounds = array<i64: 64, 128>}]} {
    %c0 = arith.constant 0 : index
    %c0_0 = arith.constant 0 : index
    %0 = vector.load %arg1[%c0, %c0_0] : memref<64x16xf32, #tpu.memory_space<vmem>>, vector<64x16xf32>
    %c0_1 = arith.constant 0 : index
    %c0_2 = arith.constant 0 : index
    %1 = vector.load %arg2[%c0_1, %c0_2] : memref<16x128xf32, #tpu.memory_space<vmem>>, vector<16x128xf32>
    %cst = arith.constant dense<0.000000e+00> : vector<64x128xf32>
    %2 = tpu.matmul %0, %1, %cst {dimension_numbers = #tpu.dot_dimension_numbers<[1], [0], [0], [1], [0, 0, 1, 1], [], []>} : vector<64x16xf32>, vector<16x128xf32>, vector<64x128xf32> -> vector<64x128xf32>
    %c0_3 = arith.constant 0 : index
    %c0_4 = arith.constant 0 : index
    %3 = vector.load %arg4[%c0_3, %c0_4] : memref<64x1xf32, #tpu.memory_space<vmem>>, vector<64x1xf32>
    %c0_5 = arith.constant 0 : index
    %c0_6 = arith.constant 0 : index
    %4 = vector.load %arg7[%c0_5, %c0_6] : memref<1x128xf32, #tpu.memory_space<vmem>>, vector<1x128xf32>
    %5 = vector.broadcast %3 : vector<64x1xf32> to vector<64x128xf32>
    %6 = vector.broadcast %4 : vector<1x128xf32> to vector<64x128xf32>
    %7 = arith.addf %5, %6 : vector<64x128xf32>
    %8 = arith.subf %7, %2 : vector<64x128xf32>
    %cst_7 = arith.constant 0.000000e+00 : f32
    %9 = vector.broadcast %cst_7 : f32 to vector<64x128xf32>
    %10 = arith.maximumf %8, %9 : vector<64x128xf32>
    %c0_8 = arith.constant 0 : index
    %c0_9 = arith.constant 0 : index
    %11 = vector.load %arg5[%c0_8, %c0_9] : memref<64x1xf32, #tpu.memory_space<vmem>>, vector<64x1xf32>
    %12 = vector.broadcast %11 : vector<64x1xf32> to vector<64x128xf32>
    %13 = arith.mulf %10, %12 : vector<64x128xf32>
    %c0_10 = arith.constant 0 : index
    %c0_11 = arith.constant 0 : index
    %14 = vector.load %arg8[%c0_10, %c0_11] : memref<1x128xf32, #tpu.memory_space<vmem>>, vector<1x128xf32>
    %15 = vector.broadcast %14 : vector<1x128xf32> to vector<64x128xf32>
    %16 = arith.mulf %13, %15 : vector<64x128xf32>
    %cst_12 = arith.constant 2.000000e+00 : f32
    %17 = vector.broadcast %cst_12 : f32 to vector<64x128xf32>
    %18 = arith.addf %16, %17 : vector<64x128xf32>
    %19 = arith.mulf %16, %18 : vector<64x128xf32>
    %20 = math.sqrt %19 : vector<64x128xf32>
    %21 = arith.addf %16, %20 : vector<64x128xf32>
    %cst_13 = arith.constant 1.000000e+00 : f32
    %22 = vector.broadcast %cst_13 : f32 to vector<64x128xf32>
    %23 = arith.addf %22, %21 : vector<64x128xf32>
    %24 = math.log %23 : vector<64x128xf32>
    %c0_14 = arith.constant 0 : index
    %c0_15 = arith.constant 0 : index
    %25 = vector.load %arg3[%c0_14, %c0_15] : memref<64x1xf32, #tpu.memory_space<vmem>>, vector<64x1xf32>
    %c0_16 = arith.constant 0 : index
    %c0_17 = arith.constant 0 : index
    %26 = vector.load %arg6[%c0_16, %c0_17] : memref<1x128xf32, #tpu.memory_space<vmem>>, vector<1x128xf32>
    %27 = vector.broadcast %25 : vector<64x1xf32> to vector<64x128xf32>
    %28 = vector.broadcast %26 : vector<1x128xf32> to vector<64x128xf32>
    %29 = arith.addf %27, %28 : vector<64x128xf32>
    %30 = arith.subf %29, %24 : vector<64x128xf32>
    %cst_18 = arith.constant 0.000000e+00 : f32
    %31 = vector.broadcast %cst_18 : f32 to vector<64x128xf32>
    %32 = arith.maximumf %30, %31 : vector<64x128xf32>
    %c0_19 = arith.constant 0 : index
    %c0_20 = arith.constant 0 : index
    %33 = vector.load %arg9[%c0_19, %c0_20] : memref<64x128xi8, #tpu.memory_space<vmem>>, vector<64x128xi8>
    %c0_i8 = arith.constant 0 : i8
    %34 = vector.broadcast %c0_i8 : i8 to vector<64x128xi8>
    %35 = arith.cmpi ne, %33, %34 : vector<64x128xi8>
    %cst_21 = arith.constant 0xFF800000 : f32
    %36 = vector.broadcast %cst_21 : f32 to vector<64x128xf32>
    %37 = arith.select %35, %32, %36 : vector<64x128xi1>, vector<64x128xf32>
    %38 = arith.truncf %37 : vector<64x128xf32> to vector<64x128xbf16>
    %c0_22 = arith.constant 0 : index
    %c0_23 = arith.constant 0 : index
    %39 = vector.load %arg10[%c0_22, %c0_23] : memref<64x128xbf16, #tpu.memory_space<vmem>>, vector<64x128xbf16>
    tpu.vector_store %arg10[%c0_22, %c0_23], %38 {strides = array<i32>} : memref<64x128xbf16, #tpu.memory_space<vmem>>, vector<64x128xbf16>,
    return
  }
  func.func @transform_0(%arg0: i32) -> (i32, i32) {
    %c0_i32 = arith.constant 0 : i32
    %c0_i32_0 = arith.constant 0 : i32
    return %arg0, %c0_i32 : i32, i32
  }
  func.func @transform_1(%arg0: i32) -> (i32, i32) {
    %c0_i32 = arith.constant 0 : i32
    %c0_i32_0 = arith.constant 0 : i32
    %c0_i32_1 = arith.constant 0 : i32
    return %c0_i32, %c0_i32_0 : i32, i32
  }
  func.func @transform_2(%arg0: i32) -> (i32, i32) {
    %c0_i32 = arith.constant 0 : i32
    %c0_i32_0 = arith.constant 0 : i32
    return %arg0, %c0_i32 : i32, i32
  }
  func.func @transform_3(%arg0: i32) -> (i32, i32) {
    %c0_i32 = arith.constant 0 : i32
    %c0_i32_0 = arith.constant 0 : i32
    return %arg0, %c0_i32 : i32, i32
  }
  func.func @transform_4(%arg0: i32) -> (i32, i32) {
    %c0_i32 = arith.constant 0 : i32
    %c0_i32_0 = arith.constant 0 : i32
    return %arg0, %c0_i32 : i32, i32
  }
  func.func @transform_5(%arg0: i32) -> (i32, i32) {
    %c0_i32 = arith.constant 0 : i32
    %c0_i32_0 = arith.constant 0 : i32
    %c0_i32_1 = arith.constant 0 : i32
    return %c0_i32, %c0_i32_0 : i32, i32
  }
  func.func @transform_6(%arg0: i32) -> (i32, i32) {
    %c0_i32 = arith.constant 0 : i32
    %c0_i32_0 = arith.constant 0 : i32
    %c0_i32_1 = arith.constant 0 : i32
    return %c0_i32, %c0_i32_0 : i32, i32
  }
  func.func @transform_7(%arg0: i32) -> (i32, i32) {
    %c0_i32 = arith.constant 0 : i32
    %c0_i32_0 = arith.constant 0 : i32
    %c0_i32_1 = arith.constant 0 : i32
    return %c0_i32, %c0_i32_0 : i32, i32
  }
  func.func @transform_8(%arg0: i32) -> (i32, i32) {
    %c0_i32 = arith.constant 0 : i32
    %c0_i32_0 = arith.constant 0 : i32
    return %arg0, %c0_i32 : i32, i32
  }
  func.func @transform_9(%arg0: i32) -> (i32, i32) {
    %c0_i32 = arith.constant 0 : i32
    %c0_i32_0 = arith.constant 0 : i32
    return %arg0, %c0_i32 : i32, i32
  }
}

</mosaic_0001>

<llo_original>
// kernel: tpu_custom_call.1
$region0: #{tpu_custom_call.1}
  #allocation0 [shape = 'u32[]', space=smem, size = 0x4, offset = 0x4, fixed_abs, tag = 'smem constant byte address 0x4 - core index']
  #allocation1 [shape = 'u32[72,128]{1,0:T(1,128)}', space=vmem, size = 0x9000, scoped, tag = 'internal scratch']
  %s0 = inlined_call_operand.vmem [shape: f32[128,16], index: 0, kind: input, shape index: {}]
  %s1 = inlined_call_operand.vmem [shape: f32[16,128], index: 1, kind: input, shape index: {}]
  %s2 = inlined_call_operand.vmem [shape: f32[128,1], index: 2, kind: input, shape index: {}]
  %s3 = inlined_call_operand.vmem [shape: f32[128,1], index: 3, kind: input, shape index: {}]
  %s4 = inlined_call_operand.vmem [shape: f32[128,1], index: 4, kind: input, shape index: {}]
  %s5 = inlined_call_operand.vmem [shape: f32[1,128], index: 5, kind: input, shape index: {}]
  %s6 = inlined_call_operand.vmem [shape: f32[1,128], index: 6, kind: input, shape index: {}]
  %s7 = inlined_call_operand.vmem [shape: f32[1,128], index: 7, kind: input, shape index: {}]
  %s8 = inlined_call_operand.vmem [shape: s8[128,128], index: 8, kind: input, shape index: {}]
  %s9 = inlined_call_operand.hbm [shape: bf16[128,128], index: 9, kind: output, shape index: {}]
  %s10 = sld [smem:[#allocation0]]
  $region69: #{tpu_custom_call.1} parent=0
    _
  %s12 = ssub.s32 1, %s10
  %s13 = scalar_select 0, %s12, %s10
  $region1: #{tpu_custom_call.1} parent=0
    #allocation2 [shape = 'u8[32768]{0}', space=vmem, size = 0x8000, scoped, tag = 'output window, operand 0']
    #allocation3 [shape = 's32[2]{0}', space=sflag, size = 0x8, scoped, tag = 'scoped memory for tpu_custom_call.1']
    %14 = vsyncpa [#allocation3], 0
    %s15 = scalar_lea.sflag [#allocation3], 1
    %16 = vsyncpa %s15, 0
    loop: start=0, step=1, limit=4
    $region2: #{tpu_custom_call.1} parent=1 // loop_pre_header
      _
    $region3: #{tpu_custom_call.1} parent=1 // loop_header
      %s18 = sphi 0, %s22
      %p19 = scmp.ge.s32.totalorder %s18, 4
      %s28 = sphi 0, %s30
      %s31 = sphi 0, %s28
      %s32 = sphi 0, %s31
      %s48 = sphi 0, %s32
      %s52 = sphi 0, %s52
      %s54 = sphi 0, %s52
      %s55 = sphi 0, %s54
      %s69 = sphi 0, %s55
      %s75 = sphi 0, %s77
      %s78 = sphi 0, %s75
      %s79 = sphi 0, %s78
      %s95 = sphi 0, %s79
      %s101 = sphi 0, %s103
      %s104 = sphi 0, %s101
      %s105 = sphi 0, %s104
      %s121 = sphi 0, %s105
      %s127 = sphi 0, %s129
      %s130 = sphi 0, %s127
      %s131 = sphi 0, %s130
      %s147 = sphi 0, %s131
      %s151 = sphi 0, %s151
      %s153 = sphi 0, %s151
      %s154 = sphi 0, %s153
      %s168 = sphi 0, %s154
      %s172 = sphi 0, %s172
      %s174 = sphi 0, %s172
      %s175 = sphi 0, %s174
      %s189 = sphi 0, %s175
      %s193 = sphi 0, %s193
      %s195 = sphi 0, %s193
      %s196 = sphi 0, %s195
      %s210 = sphi 0, %s196
      %s216 = sphi 0, %s218
      %s219 = sphi 0, %s216
      %s220 = sphi 0, %s219
      %s236 = sphi 0, %s220
      %s242 = sphi 0, %s244
      %s245 = sphi 0, %s242
      %s246 = sphi 0, %s245
      %s262 = sphi 0, %s246
    $region4: #{tpu_custom_call.1} parent=1 // loop_header_branch
      %21 = sbr.rel (%p19) target = $region8
    $region5: #{tpu_custom_call.1} parent=1 // loop_body
      %s23 = ssub.s32 %s18, 1
      %s24 = ssub.s32 %s18, 2
      %s25 = sadd.s32 %s18, 1
      %s26 = ssub.s32 %s18, %s25
      %p27 = scmp.eq.s32.totalorder %s26, 0
      %s29 = sadd.s32 %s28, 1
      %s30 = scalar_select %p27, %s28, %s29
      %p33 = pneg %p27
      %p34 = scmp.eq.s32.totalorder %s18, 1
      %p35 = por %p33, %p34
      %p36 = scmp.ne.s32.totalorder %s28, %s31
      %p37 = scmp.eq.s32.totalorder %s18, 0
      %p38 = por %p36, %p37
      %p39 = scmp.ne.s32.totalorder %s28, %s31
      %p40 = scmp.eq.s32.totalorder %s23, 1
      %p41 = por %p39, %p40
      %p42 = scmp.ne.s32.totalorder %s31, %s32
      %p43 = scmp.eq.s32.totalorder %s23, 0
      %p44 = por %p42, %p43
      %p45 = scmp.ne.s32.totalorder %s31, %s32
      %p46 = scmp.eq.s32.totalorder %s24, 1
      %p47 = por %p45, %p46
      %p49 = scmp.ne.s32.totalorder %s32, %s48
      %p50 = scmp.eq.s32.totalorder %s24, 0
      %p51 = por %p49, %p50
      %s53 = sadd.s32 %s52, 1
      %p56 = scmp.eq.s32.totalorder %s18, 1
      %p57 = scmp.ne.s32.totalorder %s52, %s54
      %p58 = scmp.eq.s32.totalorder %s18, 0
      %p59 = por %p57, %p58
      %p60 = scmp.ne.s32.totalorder %s52, %s54
      %p61 = scmp.eq.s32.totalorder %s23, 1
      %p62 = por %p60, %p61
      %p63 = scmp.ne.s32.totalorder %s54, %s55
      %p64 = scmp.eq.s32.totalorder %s23, 0
      %p65 = por %p63, %p64
      %p66 = scmp.ne.s32.totalorder %s54, %s55
      %p67 = scmp.eq.s32.totalorder %s24, 1
      %p68 = por %p66, %p67
      %p70 = scmp.ne.s32.totalorder %s55, %s69
      %p71 = scmp.eq.s32.totalorder %s24, 0
      %p72 = por %p70, %p71
      %s73 = ssub.s32 %s18, %s25
      %p74 = scmp.eq.s32.totalorder %s73, 0
      %s76 = sadd.s32 %s75, 1
      %s77 = scalar_select %p74, %s75, %s76
      %p80 = pneg %p74
      %p81 = scmp.eq.s32.totalorder %s18, 1
      %p82 = por %p80, %p81
      %p83 = scmp.ne.s32.totalorder %s75, %s78
      %p84 = scmp.eq.s32.totalorder %s18, 0
      %p85 = por %p83, %p84
      %p86 = scmp.ne.s32.totalorder %s75, %s78
      %p87 = scmp.eq.s32.totalorder %s23, 1
      %p88 = por %p86, %p87
      %p89 = scmp.ne.s32.totalorder %s78, %s79
      %p90 = scmp.eq.s32.totalorder %s23, 0
      %p91 = por %p89, %p90
      %p92 = scmp.ne.s32.totalorder %s78, %s79
      %p93 = scmp.eq.s32.totalorder %s24, 1
      %p94 = por %p92, %p93
      %p96 = scmp.ne.s32.totalorder %s79, %s95
      %p97 = scmp.eq.s32.totalorder %s24, 0
      %p98 = por %p96, %p97
      %s99 = ssub.s32 %s18, %s25
      %p100 = scmp.eq.s32.totalorder %s99, 0
      %s102 = sadd.s32 %s101, 1
      %s103 = scalar_select %p100, %s101, %s102
      %p106 = pneg %p100
      %p107 = scmp.eq.s32.totalorder %s18, 1
      %p108 = por %p106, %p107
      %p109 = scmp.ne.s32.totalorder %s101, %s104
      %p110 = scmp.eq.s32.totalorder %s18, 0
      %p111 = por %p109, %p110
      %p112 = scmp.ne.s32.totalorder %s101, %s104
      %p113 = scmp.eq.s32.totalorder %s23, 1
      %p114 = por %p112, %p113
      %p115 = scmp.ne.s32.totalorder %s104, %s105
      %p116 = scmp.eq.s32.totalorder %s23, 0
      %p117 = por %p115, %p116
      %p118 = scmp.ne.s32.totalorder %s104, %s105
      %p119 = scmp.eq.s32.totalorder %s24, 1
      %p120 = por %p118, %p119
      %p122 = scmp.ne.s32.totalorder %s105, %s121
      %p123 = scmp.eq.s32.totalorder %s24, 0
      %p124 = por %p122, %p123
      %s125 = ssub.s32 %s18, %s25
      %p126 = scmp.eq.s32.totalorder %s125, 0
      %s128 = sadd.s32 %s127, 1
      %s129 = scalar_select %p126, %s127, %s128
      %p132 = pneg %p126
      %p133 = scmp.eq.s32.totalorder %s18, 1
      %p134 = por %p132, %p133
      %p135 = scmp.ne.s32.totalorder %s127, %s130
      %p136 = scmp.eq.s32.totalorder %s18, 0
      %p137 = por %p135, %p136
      %p138 = scmp.ne.s32.totalorder %s127, %s130
      %p139 = scmp.eq.s32.totalorder %s23, 1
      %p140 = por %p138, %p139
      %p141 = scmp.ne.s32.totalorder %s130, %s131
      %p142 = scmp.eq.s32.totalorder %s23, 0
      %p143 = por %p141, %p142
      %p144 = scmp.ne.s32.totalorder %s130, %s131
      %p145 = scmp.eq.s32.totalorder %s24, 1
      %p146 = por %p144, %p145
      %p148 = scmp.ne.s32.totalorder %s131, %s147
      %p149 = scmp.eq.s32.totalorder %s24, 0
      %p150 = por %p148, %p149
      %s152 = sadd.s32 %s151, 1
      %p155 = scmp.eq.s32.totalorder %s18, 1
      %p156 = scmp.ne.s32.totalorder %s151, %s153
      %p157 = scmp.eq.s32.totalorder %s18, 0
      %p158 = por %p156, %p157
      %p159 = scmp.ne.s32.totalorder %s151, %s153
      %p160 = scmp.eq.s32.totalorder %s23, 1
      %p161 = por %p159, %p160
      %p162 = scmp.ne.s32.totalorder %s153, %s154
      %p163 = scmp.eq.s32.totalorder %s23, 0
      %p164 = por %p162, %p163
      %p165 = scmp.ne.s32.totalorder %s153, %s154
      %p166 = scmp.eq.s32.totalorder %s24, 1
      %p167 = por %p165, %p166
      %p169 = scmp.ne.s32.totalorder %s154, %s168
      %p170 = scmp.eq.s32.totalorder %s24, 0
      %p171 = por %p169, %p170
      %s173 = sadd.s32 %s172, 1
      %p176 = scmp.eq.s32.totalorder %s18, 1
      %p177 = scmp.ne.s32.totalorder %s172, %s174
      %p178 = scmp.eq.s32.totalorder %s18, 0
      %p179 = por %p177, %p178
      %p180 = scmp.ne.s32.totalorder %s172, %s174
      %p181 = scmp.eq.s32.totalorder %s23, 1
      %p182 = por %p180, %p181
      %p183 = scmp.ne.s32.totalorder %s174, %s175
      %p184 = scmp.eq.s32.totalorder %s23, 0
      %p185 = por %p183, %p184
      %p186 = scmp.ne.s32.totalorder %s174, %s175
      %p187 = scmp.eq.s32.totalorder %s24, 1
      %p188 = por %p186, %p187
      %p190 = scmp.ne.s32.totalorder %s175, %s189
      %p191 = scmp.eq.s32.totalorder %s24, 0
      %p192 = por %p190, %p191
      %s194 = sadd.s32 %s193, 1
      %p197 = scmp.eq.s32.totalorder %s18, 1
      %p198 = scmp.ne.s32.totalorder %s193, %s195
      %p199 = scmp.eq.s32.totalorder %s18, 0
      %p200 = por %p198, %p199
      %p201 = scmp.ne.s32.totalorder %s193, %s195
      %p202 = scmp.eq.s32.totalorder %s23, 1
      %p203 = por %p201, %p202
      %p204 = scmp.ne.s32.totalorder %s195, %s196
      %p205 = scmp.eq.s32.totalorder %s23, 0
      %p206 = por %p204, %p205
      %p207 = scmp.ne.s32.totalorder %s195, %s196
      %p208 = scmp.eq.s32.totalorder %s24, 1
      %p209 = por %p207, %p208
      %p211 = scmp.ne.s32.totalorder %s196, %s210
      %p212 = scmp.eq.s32.totalorder %s24, 0
      %p213 = por %p211, %p212
      %s214 = ssub.s32 %s18, %s25
      %p215 = scmp.eq.s32.totalorder %s214, 0
      %s217 = sadd.s32 %s216, 1
      %s218 = scalar_select %p215, %s216, %s217
      %p221 = pneg %p215
      %p222 = scmp.eq.s32.totalorder %s18, 1
      %p223 = por %p221, %p222
      %p224 = scmp.ne.s32.totalorder %s216, %s219
      %p225 = scmp.eq.s32.totalorder %s18, 0
      %p226 = por %p224, %p225
      %p227 = scmp.ne.s32.totalorder %s216, %s219
      %p228 = scmp.eq.s32.totalorder %s23, 1
      %p229 = por %p227, %p228
      %p230 = scmp.ne.s32.totalorder %s219, %s220
      %p231 = scmp.eq.s32.totalorder %s23, 0
      %p232 = por %p230, %p231
      %p233 = scmp.ne.s32.totalorder %s219, %s220
      %p234 = scmp.eq.s32.totalorder %s24, 1
      %p235 = por %p233, %p234
      %p237 = scmp.ne.s32.totalorder %s220, %s236
      %p238 = scmp.eq.s32.totalorder %s24, 0
      %p239 = por %p237, %p238
      %s240 = ssub.s32 %s18, %s25
      %p241 = scmp.eq.s32.totalorder %s240, 0
      %s243 = sadd.s32 %s242, 1
      %s244 = scalar_select %p241, %s242, %s243
      %p247 = pneg %p241
      %p248 = scmp.eq.s32.totalorder %s18, 1
      %p249 = por %p247, %p248
      %p250 = scmp.ne.s32.totalorder %s242, %s245
      %p251 = scmp.eq.s32.totalorder %s18, 0
      %p252 = por %p250, %p251
      %p253 = scmp.ne.s32.totalorder %s242, %s245
      %p254 = scmp.eq.s32.totalorder %s23, 1
      %p255 = por %p253, %p254
      %p256 = scmp.ne.s32.totalorder %s245, %s246
      %p257 = scmp.eq.s32.totalorder %s23, 0
      %p258 = por %p256, %p257
      %p259 = scmp.ne.s32.totalorder %s245, %s246
      %p260 = scmp.eq.s32.totalorder %s24, 1
      %p261 = por %p259, %p260
      %p263 = scmp.ne.s32.totalorder %s246, %s262
      %p264 = scmp.eq.s32.totalorder %s24, 0
      %p265 = por %p263, %p264
      %p266 = scmp.le.s32.totalorder 1, %s18
      %p267 = scmp.lt.s32.totalorder %s18, 3
      %p268 = pnand %p266, %p267
      %p269 = pneg %p268
      // Predicated region
      $region9: #{tpu_custom_call.1} parent=5 // pred_check
        _
      $region10: #{tpu_custom_call.1} parent=5 // pred_check_branch
        %271 = sbr.rel (%p268) target = $region12
      $region11: #{tpu_custom_call.1} parent=5 // pred_region
        %s272 = ssub.s32 %s18, 1
        // Predicated region
        $region13: #{tpu_custom_call.1} parent=11 // pred_check
          %p273 = pneg %p65
        $region14: #{tpu_custom_call.1} parent=11 // pred_check_branch
          %275 = sbr.rel (%p273) target = $region16
        $region15: #{tpu_custom_call.1} parent=11 // pred_region
          _
        $region16: #{tpu_custom_call.1} parent=11 // pred_fallthru
          _
        // Predicated region
        $region17: #{tpu_custom_call.1} parent=11 // pred_check
          %p276 = pneg %p164
        $region18: #{tpu_custom_call.1} parent=11 // pred_check_branch
          %278 = sbr.rel (%p276) target = $region20
        $region19: #{tpu_custom_call.1} parent=11 // pred_region
          _
        $region20: #{tpu_custom_call.1} parent=11 // pred_fallthru
          _
        // Predicated region
        $region21: #{tpu_custom_call.1} parent=11 // pred_check
          %p279 = pneg %p185
        $region22: #{tpu_custom_call.1} parent=11 // pred_check_branch
          %281 = sbr.rel (%p279) target = $region24
        $region23: #{tpu_custom_call.1} parent=11 // pred_region
          _
        $region24: #{tpu_custom_call.1} parent=11 // pred_fallthru
          _
        // Predicated region
        $region25: #{tpu_custom_call.1} parent=11 // pred_check
          %p282 = pneg %p206
        $region26: #{tpu_custom_call.1} parent=11 // pred_check_branch
          %284 = sbr.rel (%p282) target = $region28
        $region27: #{tpu_custom_call.1} parent=11 // pred_region
          _
        $region28: #{tpu_custom_call.1} parent=11 // pred_fallthru
          _
      $region12: #{tpu_custom_call.1} parent=5 // pred_fallthru
        _
      %p285 = scmp.lt.s32.totalorder %s18, 2
      // Predicated region
      $region29: #{tpu_custom_call.1} parent=5 // pred_check
        %p286 = pneg %p285
      $region30: #{tpu_custom_call.1} parent=5 // pred_check_branch
        %288 = sbr.rel (%p286) target = $region32
      $region31: #{tpu_custom_call.1} parent=5 // pred_region
        // Predicated region
        $region33: #{tpu_custom_call.1} parent=31 // pred_check
          %p289 = pneg %p38
        $region34: #{tpu_custom_call.1} parent=31 // pred_check_branch
          %291 = sbr.rel (%p289) target = $region36
        $region35: #{tpu_custom_call.1} parent=31 // pred_region
          %s292 = smul.u32 8, %s18
          %p293 = scmp.lt.s32.totalorder %s292, 15
          %s294 = scalar_select %p293, %s292, 15
          %s295 = smul.addr %s294, 8
          %s296 = scalar_lea.vmem %s0, %s295
          %s297 = smul.u32 8, %s18
        $region36: #{tpu_custom_call.1} parent=31 // pred_fallthru
          _
        // Predicated region
        $region37: #{tpu_custom_call.1} parent=31 // pred_check
          %p298 = pneg %p85
        $region38: #{tpu_custom_call.1} parent=31 // pred_check_branch
          %300 = sbr.rel (%p298) target = $region40
        $region39: #{tpu_custom_call.1} parent=31 // pred_region
          %s301 = smul.u32 8, %s18
          %p302 = scmp.lt.s32.totalorder %s301, 15
          %s303 = scalar_select %p302, %s301, 15
          %s304 = smul.addr %s303, 8
          %s305 = scalar_lea.vmem %s2, %s304
          %s306 = smul.u32 8, %s18
        $region40: #{tpu_custom_call.1} parent=31 // pred_fallthru
          _
        // Predicated region
        $region41: #{tpu_custom_call.1} parent=31 // pred_check
          %p307 = pneg %p111
        $region42: #{tpu_custom_call.1} parent=31 // pred_check_branch
          %309 = sbr.rel (%p307) target = $region44
        $region43: #{tpu_custom_call.1} parent=31 // pred_region
          %s310 = smul.u32 8, %s18
          %p311 = scmp.lt.s32.totalorder %s310, 15
          %s312 = scalar_select %p311, %s310, 15
          %s313 = smul.addr %s312, 8
          %s314 = scalar_lea.vmem %s3, %s313
          %s315 = smul.u32 8, %s18
        $region44: #{tpu_custom_call.1} parent=31 // pred_fallthru
          _
        // Predicated region
        $region45: #{tpu_custom_call.1} parent=31 // pred_check
          %p316 = pneg %p137
        $region46: #{tpu_custom_call.1} parent=31 // pred_check_branch
          %318 = sbr.rel (%p316) target = $region48
        $region47: #{tpu_custom_call.1} parent=31 // pred_region
          %s319 = smul.u32 8, %s18
          %p320 = scmp.lt.s32.totalorder %s319, 15
          %s321 = scalar_select %p320, %s319, 15
          %s322 = smul.addr %s321, 8
          %s323 = scalar_lea.vmem %s4, %s322
          %s324 = smul.u32 8, %s18
        $region48: #{tpu_custom_call.1} parent=31 // pred_fallthru
          _
        // Predicated region
        $region49: #{tpu_custom_call.1} parent=31 // pred_check
          %p325 = pneg %p226
        $region50: #{tpu_custom_call.1} parent=31 // pred_check_branch
          %327 = sbr.rel (%p325) target = $region52
        $region51: #{tpu_custom_call.1} parent=31 // pred_region
          %s328 = smul.u32 2, %s18
          %p329 = scmp.lt.s32.totalorder %s328, 3
          %s330 = scalar_select %p329, %s328, 3
          %s331 = smul.addr %s330, 8
          %s332 = scalar_lea.vmem %s8, %s331
          %s333 = smul.u32 2, %s18
        $region52: #{tpu_custom_call.1} parent=31 // pred_fallthru
          _
      $region32: #{tpu_custom_call.1} parent=5 // pred_fallthru
        _
      %p334 = scmp.le.s32.totalorder 1, %s18
      %p335 = scmp.lt.s32.totalorder %s18, 3
      %p336 = pnand %p334, %p335
      %p337 = pneg %p336
      // Predicated region
      $region53: #{tpu_custom_call.1} parent=5 // pred_check
        _
      $region54: #{tpu_custom_call.1} parent=5 // pred_check_branch
        %339 = sbr.rel (%p336) target = $region56
      $region55: #{tpu_custom_call.1} parent=5 // pred_region
        %s340 = ssub.s32 %s18, 1
        %s341 = smul.u32 8, %s23
        %p342 = scmp.lt.s32.totalorder %s341, 15
        %s343 = scalar_select %p342, %s341, 15
        %s344 = smul.addr %s343, 8
        %s345 = scalar_lea.vmem %s0, %s344
        %p346 = pneg %p44
        %p347 = pneg %p41
        %p348 = pneg %p65
        %p349 = pneg %p62
        %s350 = smul.u32 8, %s23
        %p351 = scmp.lt.s32.totalorder %s350, 15
        %s352 = scalar_select %p351, %s350, 15
        %s353 = smul.addr %s352, 8
        %s354 = scalar_lea.vmem %s2, %s353
        %p355 = pneg %p91
        %p356 = pneg %p88
        %s357 = smul.u32 8, %s23
        %p358 = scmp.lt.s32.totalorder %s357, 15
        %s359 = scalar_select %p358, %s357, 15
        %s360 = smul.addr %s359, 8
        %s361 = scalar_lea.vmem %s3, %s360
        %p362 = pneg %p117
        %p363 = pneg %p114
        %s364 = smul.u32 8, %s23
        %p365 = scmp.lt.s32.totalorder %s364, 15
        %s366 = scalar_select %p365, %s364, 15
        %s367 = smul.addr %s366, 8
        %s368 = scalar_lea.vmem %s4, %s367
        %p369 = pneg %p143
        %p370 = pneg %p140
        %p371 = pneg %p164
        %p372 = pneg %p161
        %p373 = pneg %p185
        %p374 = pneg %p182
        %p375 = pneg %p206
        %p376 = pneg %p203
        %s377 = smul.u32 2, %s23
        %p378 = scmp.lt.s32.totalorder %s377, 3
        %s379 = scalar_select %p378, %s377, 3
        %s380 = smul.addr %s379, 8
        %s381 = scalar_lea.vmem %s8, %s380
        %p382 = pneg %p232
        %p383 = pneg %p229
        %p384 = pneg %p258
        %p385 = pneg %p255
        %s386 = sand.u32 %s245, 1
        %s387 = scalar_lea.sflag [#allocation3], %s386
        %s388 = sand.u32 %s245, 1
        %s389 = smul.addr %s388, 32
        %s390 = scalar_lea.vmem [#allocation2], %s389
        %s391 = smul.u32 8, %s23
        %p392 = scmp.lt.s32.totalorder %s391, 15
        %s393 = scalar_select %p392, %s391, 15
        %s394 = smul.addr %s393, 8
        %s395 = scalar_lea.vmem %s0, %s394
        %s396 = smul.u32 8, %s23
        %s397 = smul.u32 8, %s23
        %p398 = scmp.lt.s32.totalorder %s397, 15
        %s399 = scalar_select %p398, %s397, 15
        %s400 = smul.addr %s399, 8
        %s401 = scalar_lea.vmem %s2, %s400
        %s402 = smul.u32 8, %s23
        %s403 = smul.u32 8, %s23
        %p404 = scmp.lt.s32.totalorder %s403, 15
        %s405 = scalar_select %p404, %s403, 15
        %s406 = smul.addr %s405, 8
        %s407 = scalar_lea.vmem %s3, %s406
        %s408 = smul.u32 8, %s23
        %s409 = smul.u32 8, %s23
        %p410 = scmp.lt.s32.totalorder %s409, 15
        %s411 = scalar_select %p410, %s409, 15
        %s412 = smul.addr %s411, 8
        %s413 = scalar_lea.vmem %s4, %s412
        %s414 = smul.u32 8, %s23
        %s415 = smul.u32 2, %s23
        %p416 = scmp.lt.s32.totalorder %s415, 3
        %s417 = scalar_select %p416, %s415, 3
        %s418 = smul.addr %s417, 8
        %s419 = scalar_lea.vmem %s8, %s418
        %s420 = smul.u32 2, %s23
        %s421 = smul.u32 8, %s23
        %v424 = vld [vmem:[%s395] sm:$0xff]
        %v425 = vld [vmem:[%s395 + $0x8] sm:$0xff]
        %v426 = vld [vmem:[%s395 + $0x10] sm:$0xff]
        %v427 = vld [vmem:[%s395 + $0x18] sm:$0xff]
        %v428 = vld [vmem:[%s395 + $0x20] sm:$0xff]
        %v429 = vld [vmem:[%s395 + $0x28] sm:$0xff]
        %v430 = vld [vmem:[%s395 + $0x30] sm:$0xff]
        %v431 = vld [vmem:[%s395 + $0x38] sm:$0xff]
        %v432 = vld [vmem:[%s1] sm:$0xff]
        %v433 = vld [vmem:[%s1 + $0x8] sm:$0xff]
        %vm434 = vcmask 130048
        %v436 = vsel %vm434, %v424, 0
        %v439 = vsel %vm434, %v425, 0
        %v442 = vsel %vm434, %v426, 0
        %v445 = vsel %vm434, %v427, 0
        %v448 = vsel %vm434, %v428, 0
        %v451 = vsel %vm434, %v429, 0
        %v454 = vsel %vm434, %v430, 0
        %v457 = vsel %vm434, %v431, 0
        %459 = vmatpush.msra.mxu0 0.0
        %460 = vmatpush.msra.mxu0 0.0
        %461 = vmatpush.msra.mxu0 0.0
        %462 = vmatpush.msra.mxu0 0.0
        %463 = vmatpush.msra.mxu0 0.0
        %464 = vmatpush.msra.mxu0 0.0
        %465 = vmatpush.msra.mxu0 0.0
        %466 = vmatpush.msra.mxu0 0.0
        %467 = vmatpush.msra.mxu0 0.0
        %468 = vmatpush.msra.mxu0 0.0
        %469 = vmatpush.msra.mxu0 0.0
        %470 = vmatpush.msra.mxu0 0.0
        %471 = vmatpush.msra.mxu0 0.0
        %472 = vmatpush.msra.mxu0 0.0
        %473 = vmatpush.msra.mxu0 %v433
        %474 = vmatpush.msra.mxu0 %v432
        %475 = vmatmul.f32.gmra.mxu0 %v436
        %v476 = vpop.f32.mrf.mxu0
        %v477 = vadd.f32 0.0, %v476
        %478 = vmatmul.f32.gmra.mxu0 %v439
        %v479 = vpop.f32.mrf.mxu0
        %v480 = vadd.f32 0.0, %v479
        %481 = vmatmul.f32.gmra.mxu0 %v442
        %v482 = vpop.f32.mrf.mxu0
        %v483 = vadd.f32 0.0, %v482
        %484 = vmatmul.f32.gmra.mxu0 %v445
        %v485 = vpop.f32.mrf.mxu0
        %v486 = vadd.f32 0.0, %v485
        %487 = vmatmul.f32.gmra.mxu0 %v448
        %v488 = vpop.f32.mrf.mxu0
        %v489 = vadd.f32 0.0, %v488
        %490 = vmatmul.f32.gmra.mxu0 %v451
        %v491 = vpop.f32.mrf.mxu0
        %v492 = vadd.f32 0.0, %v491
        %493 = vmatmul.f32.gmra.mxu0 %v454
        %v494 = vpop.f32.mrf.mxu0
        %v495 = vadd.f32 0.0, %v494
        %496 = vmatmul.f32.gmra.mxu0 %v457
        %v497 = vpop.f32.mrf.mxu0
        %v498 = vadd.f32 0.0, %v497
        %499 = vdwg.mxu0
        %v500 = vld [vmem:[%s407] sm:$0xff]
        %v501 = vld [vmem:[%s407 + $0x8] sm:$0xff]
        %v502 = vld [vmem:[%s407 + $0x10] sm:$0xff]
        %v503 = vld [vmem:[%s407 + $0x18] sm:$0xff]
        %v504 = vld [vmem:[%s407 + $0x20] sm:$0xff]
        %v505 = vld [vmem:[%s407 + $0x28] sm:$0xff]
        %v506 = vld [vmem:[%s407 + $0x30] sm:$0xff]
        %v507 = vld [vmem:[%s407 + $0x38] sm:$0xff]
        %v508 = vld [vmem:[%s6] sm:$0x1]
        %510 = vset.pattern.permute.xlu0 0
        %511 = vperm.xlu0 %510, %v500
        %v512 = vpop.permute.xlu0 %511
        %515 = vset.pattern.permute.xlu0 0
        %516 = vperm.xlu0 %515, %v501
        %v517 = vpop.permute.xlu0 %516
        %520 = vset.pattern.permute.xlu0 0
        %521 = vperm.xlu0 %520, %v502
        %v522 = vpop.permute.xlu0 %521
        %525 = vset.pattern.permute.xlu0 0
        %526 = vperm.xlu0 %525, %v503
        %v527 = vpop.permute.xlu0 %526
        %530 = vset.pattern.permute.xlu0 0
        %531 = vperm.xlu0 %530, %v504
        %v532 = vpop.permute.xlu0 %531
        %535 = vset.pattern.permute.xlu0 0
        %536 = vperm.xlu0 %535, %v505
        %v537 = vpop.permute.xlu0 %536
        %540 = vset.pattern.permute.xlu0 0
        %541 = vperm.xlu0 %540, %v506
        %v542 = vpop.permute.xlu0 %541
        %545 = vset.pattern.permute.xlu0 0
        %546 = vperm.xlu0 %545, %v507
        %v547 = vpop.permute.xlu0 %546
        %v550 = vperm.slane %v508, 0
        %v552 = vadd.f32 %v512, %v550
        %v553 = vadd.f32 %v517, %v550
        %v554 = vadd.f32 %v522, %v550
        %v555 = vadd.f32 %v527, %v550
        %v556 = vadd.f32 %v532, %v550
        %v557 = vadd.f32 %v537, %v550
        %v558 = vadd.f32 %v542, %v550
        %v559 = vadd.f32 %v547, %v550
        %v560 = vsub.f32 %v552, %v477
        %v561 = vsub.f32 %v553, %v480
        %v562 = vsub.f32 %v554, %v483
        %v563 = vsub.f32 %v555, %v486
        %v564 = vsub.f32 %v556, %v489
        %v565 = vsub.f32 %v557, %v492
        %v566 = vsub.f32 %v558, %v495
        %v567 = vsub.f32 %v559, %v498
        %v568 = vmax.f32 %v560, 0.0
        %v569 = vmax.f32 %v561, 0.0
        %v570 = vmax.f32 %v562, 0.0
        %v571 = vmax.f32 %v563, 0.0
        %v572 = vmax.f32 %v564, 0.0
        %v573 = vmax.f32 %v565, 0.0
        %v574 = vmax.f32 %v566, 0.0
        %v575 = vmax.f32 %v567, 0.0
        %v576 = vld [vmem:[%s413] sm:$0xff]
        %v577 = vld [vmem:[%s413 + $0x8] sm:$0xff]
        %v578 = vld [vmem:[%s413 + $0x10] sm:$0xff]
        %v579 = vld [vmem:[%s413 + $0x18] sm:$0xff]
        %v580 = vld [vmem:[%s413 + $0x20] sm:$0xff]
        %v581 = vld [vmem:[%s413 + $0x28] sm:$0xff]
        %v582 = vld [vmem:[%s413 + $0x30] sm:$0xff]
        %v583 = vld [vmem:[%s413 + $0x38] sm:$0xff]
        %585 = vset.pattern.permute.xlu0 0
        %586 = vperm.xlu0 %585, %v576
        %v587 = vpop.permute.xlu0 %586
        %590 = vset.pattern.permute.xlu0 0
        %591 = vperm.xlu0 %590, %v577
        %v592 = vpop.permute.xlu0 %591
        %595 = vset.pattern.permute.xlu0 0
        %596 = vperm.xlu0 %595, %v578
        %v597 = vpop.permute.xlu0 %596
        %600 = vset.pattern.permute.xlu0 0
        %601 = vperm.xlu0 %600, %v579
        %v602 = vpop.permute.xlu0 %601
        %605 = vset.pattern.permute.xlu0 0
        %606 = vperm.xlu0 %605, %v580
        %v607 = vpop.permute.xlu0 %606
        %610 = vset.pattern.permute.xlu0 0
        %611 = vperm.xlu0 %610, %v581
        %v612 = vpop.permute.xlu0 %611
        %615 = vset.pattern.permute.xlu0 0
        %616 = vperm.xlu0 %615, %v582
        %v617 = vpop.permute.xlu0 %616
        %620 = vset.pattern.permute.xlu0 0
        %621 = vperm.xlu0 %620, %v583
        %v622 = vpop.permute.xlu0 %621
        %v624 = vmul.f32 %v568, %v587
        %v625 = vmul.f32 %v569, %v592
        %v626 = vmul.f32 %v570, %v597
        %v627 = vmul.f32 %v571, %v602
        %v628 = vmul.f32 %v572, %v607
        %v629 = vmul.f32 %v573, %v612
        %v630 = vmul.f32 %v574, %v617
        %v631 = vmul.f32 %v575, %v622
        %v632 = vld [vmem:[%s7] sm:$0x1]
        %v634 = vperm.slane %v632, 0
        %v636 = vmul.f32 %v624, %v634
        %v637 = vmul.f32 %v625, %v634
        %v638 = vmul.f32 %v626, %v634
        %v639 = vmul.f32 %v627, %v634
        %v640 = vmul.f32 %v628, %v634
        %v641 = vmul.f32 %v629, %v634
        %v642 = vmul.f32 %v630, %v634
        %v643 = vmul.f32 %v631, %v634
        %v644 = vadd.f32 %v636, 2.0
        %v645 = vadd.f32 %v637, 2.0
        %v646 = vadd.f32 %v638, 2.0
        %v647 = vadd.f32 %v639, 2.0
        %v648 = vadd.f32 %v640, 2.0
        %v649 = vadd.f32 %v641, 2.0
        %v650 = vadd.f32 %v642, 2.0
        %v651 = vadd.f32 %v643, 2.0
        %v652 = vmul.f32 %v636, %v644
        %v653 = vmul.f32 %v637, %v645
        %v654 = vmul.f32 %v638, %v646
        %v655 = vmul.f32 %v639, %v647
        %v656 = vmul.f32 %v640, %v648
        %v657 = vmul.f32 %v641, %v649
        %v658 = vmul.f32 %v642, %v650
        %v659 = vmul.f32 %v643, %v651
        %v660 = vrsqrt.pop %v652
        %v661 = vmul.f32 %v660, %v652
        %v662 = vmul.f32 %v661, %v660
        %v663 = vmul.f32 0.5, %v662
        %v664 = vsub.f32 1.5, %v663
        %v665 = vmul.f32 %v660, %v664
        %v666 = vmul.f32 %v652, %v665
        %vm667 = vcmp.eq.f32.partialorder %v652, inf
        %v668 = vsel %vm667, %v652, %v666
        %vm669 = vcmp.eq.f32.partialorder %v652, 0.0
        %v670 = vand.u32 %v652, 2147483648
        %v671 = vsel %vm669, %v670, %v668
        %v672 = vrsqrt.pop %v653
        %v673 = vmul.f32 %v672, %v653
        %v674 = vmul.f32 %v673, %v672
        %v675 = vmul.f32 0.5, %v674
        %v676 = vsub.f32 1.5, %v675
        %v677 = vmul.f32 %v672, %v676
        %v678 = vmul.f32 %v653, %v677
        %vm679 = vcmp.eq.f32.partialorder %v653, inf
        %v680 = vsel %vm679, %v653, %v678
        %vm681 = vcmp.eq.f32.partialorder %v653, 0.0
        %v682 = vand.u32 %v653, 2147483648
        %v683 = vsel %vm681, %v682, %v680
        %v684 = vrsqrt.pop %v654
        %v685 = vmul.f32 %v684, %v654
        %v686 = vmul.f32 %v685, %v684
        %v687 = vmul.f32 0.5, %v686
        %v688 = vsub.f32 1.5, %v687
        %v689 = vmul.f32 %v684, %v688
        %v690 = vmul.f32 %v654, %v689
        %vm691 = vcmp.eq.f32.partialorder %v654, inf
        %v692 = vsel %vm691, %v654, %v690
        %vm693 = vcmp.eq.f32.partialorder %v654, 0.0
        %v694 = vand.u32 %v654, 2147483648
        %v695 = vsel %vm693, %v694, %v692
        %v696 = vrsqrt.pop %v655
        %v697 = vmul.f32 %v696, %v655
        %v698 = vmul.f32 %v697, %v696
        %v699 = vmul.f32 0.5, %v698
        %v700 = vsub.f32 1.5, %v699
        %v701 = vmul.f32 %v696, %v700
        %v702 = vmul.f32 %v655, %v701
        %vm703 = vcmp.eq.f32.partialorder %v655, inf
        %v704 = vsel %vm703, %v655, %v702
        %vm705 = vcmp.eq.f32.partialorder %v655, 0.0
        %v706 = vand.u32 %v655, 2147483648
        %v707 = vsel %vm705, %v706, %v704
        %v708 = vrsqrt.pop %v656
        %v709 = vmul.f32 %v708, %v656
        %v710 = vmul.f32 %v709, %v708
        %v711 = vmul.f32 0.5, %v710
        %v712 = vsub.f32 1.5, %v711
        %v713 = vmul.f32 %v708, %v712
        %v714 = vmul.f32 %v656, %v713
        %vm715 = vcmp.eq.f32.partialorder %v656, inf
        %v716 = vsel %vm715, %v656, %v714
        %vm717 = vcmp.eq.f32.partialorder %v656, 0.0
        %v718 = vand.u32 %v656, 2147483648
        %v719 = vsel %vm717, %v718, %v716
        %v720 = vrsqrt.pop %v657
        %v721 = vmul.f32 %v720, %v657
        %v722 = vmul.f32 %v721, %v720
        %v723 = vmul.f32 0.5, %v722
        %v724 = vsub.f32 1.5, %v723
        %v725 = vmul.f32 %v720, %v724
        %v726 = vmul.f32 %v657, %v725
        %vm727 = vcmp.eq.f32.partialorder %v657, inf
        %v728 = vsel %vm727, %v657, %v726
        %vm729 = vcmp.eq.f32.partialorder %v657, 0.0
        %v730 = vand.u32 %v657, 2147483648
        %v731 = vsel %vm729, %v730, %v728
        %v732 = vrsqrt.pop %v658
        %v733 = vmul.f32 %v732, %v658
        %v734 = vmul.f32 %v733, %v732
        %v735 = vmul.f32 0.5, %v734
        %v736 = vsub.f32 1.5, %v735
        %v737 = vmul.f32 %v732, %v736
        %v738 = vmul.f32 %v658, %v737
        %vm739 = vcmp.eq.f32.partialorder %v658, inf
        %v740 = vsel %vm739, %v658, %v738
        %vm741 = vcmp.eq.f32.partialorder %v658, 0.0
        %v742 = vand.u32 %v658, 2147483648
        %v743 = vsel %vm741, %v742, %v740
        %v744 = vrsqrt.pop %v659
        %v745 = vmul.f32 %v744, %v659
        %v746 = vmul.f32 %v745, %v744
        %v747 = vmul.f32 0.5, %v746
        %v748 = vsub.f32 1.5, %v747
        %v749 = vmul.f32 %v744, %v748
        %v750 = vmul.f32 %v659, %v749
        %vm751 = vcmp.eq.f32.partialorder %v659, inf
        %v752 = vsel %vm751, %v659, %v750
        %vm753 = vcmp.eq.f32.partialorder %v659, 0.0
        %v754 = vand.u32 %v659, 2147483648
        %v755 = vsel %vm753, %v754, %v752
        %v756 = vadd.f32 %v636, %v671
        %v757 = vadd.f32 %v637, %v683
        %v758 = vadd.f32 %v638, %v695
        %v759 = vadd.f32 %v639, %v707
        %v760 = vadd.f32 %v640, %v719
        %v761 = vadd.f32 %v641, %v731
        %v762 = vadd.f32 %v642, %v743
        %v763 = vadd.f32 %v643, %v755
        %v764 = vadd.f32 %v756, 1.0
        %v765 = vadd.f32 %v757, 1.0
        %v766 = vadd.f32 %v758, 1.0
        %v767 = vadd.f32 %v759, 1.0
        %v768 = vadd.f32 %v760, 1.0
        %v769 = vadd.f32 %v761, 1.0
        %v770 = vadd.f32 %v762, 1.0
        %v771 = vadd.f32 %v763, 1.0
        %v772 = vlog2.pop %v764
        %v773 = vmul.f32 %v772, 0.6931472
        %v774 = vlog2.pop %v765
        %v775 = vmul.f32 %v774, 0.6931472
        %v776 = vlog2.pop %v766
        %v777 = vmul.f32 %v776, 0.6931472
        %v778 = vlog2.pop %v767
        %v779 = vmul.f32 %v778, 0.6931472
        %v780 = vlog2.pop %v768
        %v781 = vmul.f32 %v780, 0.6931472
        %v782 = vlog2.pop %v769
        %v783 = vmul.f32 %v782, 0.6931472
        %v784 = vlog2.pop %v770
        %v785 = vmul.f32 %v784, 0.6931472
        %v786 = vlog2.pop %v771
        %v787 = vmul.f32 %v786, 0.6931472
        %v788 = vld [vmem:[%s401] sm:$0xff]
        %v789 = vld [vmem:[%s401 + $0x8] sm:$0xff]
        %v790 = vld [vmem:[%s401 + $0x10] sm:$0xff]
        %v791 = vld [vmem:[%s401 + $0x18] sm:$0xff]
        %v792 = vld [vmem:[%s401 + $0x20] sm:$0xff]
        %v793 = vld [vmem:[%s401 + $0x28] sm:$0xff]
        %v794 = vld [vmem:[%s401 + $0x30] sm:$0xff]
        %v795 = vld [vmem:[%s401 + $0x38] sm:$0xff]
        %v796 = vld [vmem:[%s5] sm:$0x1]
        %798 = vset.pattern.permute.xlu0 0
        %799 = vperm.xlu0 %798, %v788
        %v800 = vpop.permute.xlu0 %799
        %803 = vset.pattern.permute.xlu0 0
        %804 = vperm.xlu0 %803, %v789
        %v805 = vpop.permute.xlu0 %804
        %808 = vset.pattern.permute.xlu0 0
        %809 = vperm.xlu0 %808, %v790
        %v810 = vpop.permute.xlu0 %809
        %813 = vset.pattern.permute.xlu0 0
        %814 = vperm.xlu0 %813, %v791
        %v815 = vpop.permute.xlu0 %814
        %818 = vset.pattern.permute.xlu0 0
        %819 = vperm.xlu0 %818, %v792
        %v820 = vpop.permute.xlu0 %819
        %823 = vset.pattern.permute.xlu0 0
        %824 = vperm.xlu0 %823, %v793
        %v825 = vpop.permute.xlu0 %824
        %828 = vset.pattern.permute.xlu0 0
        %829 = vperm.xlu0 %828, %v794
        %v830 = vpop.permute.xlu0 %829
        %833 = vset.pattern.permute.xlu0 0
        %834 = vperm.xlu0 %833, %v795
        %v835 = vpop.permute.xlu0 %834
        %v838 = vperm.slane %v796, 0
        %v840 = vadd.f32 %v800, %v838
        %v841 = vadd.f32 %v805, %v838
        %v842 = vadd.f32 %v810, %v838
        %v843 = vadd.f32 %v815, %v838
        %v844 = vadd.f32 %v820, %v838
        %v845 = vadd.f32 %v825, %v838
        %v846 = vadd.f32 %v830, %v838
        %v847 = vadd.f32 %v835, %v838
        %v848 = vsub.f32 %v840, %v773
        %v849 = vsub.f32 %v841, %v775
        %v850 = vsub.f32 %v842, %v777
        %v851 = vsub.f32 %v843, %v779
        %v852 = vsub.f32 %v844, %v781
        %v853 = vsub.f32 %v845, %v783
        %v854 = vsub.f32 %v846, %v785
        %v855 = vsub.f32 %v847, %v787
        %v856 = vmax.f32 %v848, 0.0
        %v857 = vmax.f32 %v849, 0.0
        %v858 = vmax.f32 %v850, 0.0
        %v859 = vmax.f32 %v851, 0.0
        %v860 = vmax.f32 %v852, 0.0
        %v861 = vmax.f32 %v853, 0.0
        %v862 = vmax.f32 %v854, 0.0
        %v863 = vmax.f32 %v855, 0.0
        %v864 = vld [vmem:[%s419] sm:$0xff]
        %v865 = vld [vmem:[%s419 + $0x8] sm:$0xff]
        %vm866 = vnez %v864
        %vm867 = vnez %v865
        %v868 = vsel %vm866, 16843009, 0
        %v869 = vsel %vm867, 16843009, 0
        %v870 = vunpack.c.0.s8 %v868
        %v871 = vunpack.c.1.s8 %v868
        %v872 = vunpack.c.2.s8 %v868
        %v873 = vunpack.c.3.s8 %v868
        %v874 = vunpack.c.0.s8 %v869
        %v875 = vunpack.c.1.s8 %v869
        %v876 = vunpack.c.2.s8 %v869
        %v877 = vunpack.c.3.s8 %v869
        %v878 = vpack.c.b16 %v870, %v870
        %v879 = vpack.c.b8 %v878, %v878
        %v880 = vpack.c.b16 %v871, %v871
        %v881 = vpack.c.b8 %v880, %v880
        %v882 = vpack.c.b16 %v872, %v872
        %v883 = vpack.c.b8 %v882, %v882
        %v884 = vpack.c.b16 %v873, %v873
        %v885 = vpack.c.b8 %v884, %v884
        %v886 = vpack.c.b16 %v874, %v874
        %v887 = vpack.c.b8 %v886, %v886
        %v888 = vpack.c.b16 %v875, %v875
        %v889 = vpack.c.b8 %v888, %v888
        %v890 = vpack.c.b16 %v876, %v876
        %v891 = vpack.c.b8 %v890, %v890
        %v892 = vpack.c.b16 %v877, %v877
        %v893 = vpack.c.b8 %v892, %v892
        %vm894 = vnez %v879
        %vm895 = vnez %v881
        %vm896 = vnez %v883
        %vm897 = vnez %v885
        %vm898 = vnez %v887
        %vm899 = vnez %v889
        %vm900 = vnez %v891
        %vm901 = vnez %v893
        %v902 = vsel %vm894, 16843009, 0
        %v903 = vsel %vm895, 16843009, 0
        %v904 = vsel %vm896, 16843009, 0
        %v905 = vsel %vm897, 16843009, 0
        %v906 = vsel %vm898, 16843009, 0
        %v907 = vsel %vm899, 16843009, 0
        %v908 = vsel %vm900, 16843009, 0
        %v909 = vsel %vm901, 16843009, 0
        %v910 = vunpack.c.0.s8 %v902
        %v911 = vunpack.c.0.s8 %v903
        %v912 = vunpack.c.0.s8 %v904
        %v913 = vunpack.c.0.s8 %v905
        %v914 = vunpack.c.0.s8 %v906
        %v915 = vunpack.c.0.s8 %v907
        %v916 = vunpack.c.0.s8 %v908
        %v917 = vunpack.c.0.s8 %v909
        %vm918 = vcmp.ne.s32.totalorder %v910, 0
        %vm919 = vcmp.ne.s32.totalorder %v911, 0
        %vm920 = vcmp.ne.s32.totalorder %v912, 0
        %vm921 = vcmp.ne.s32.totalorder %v913, 0
        %vm922 = vcmp.ne.s32.totalorder %v914, 0
        %vm923 = vcmp.ne.s32.totalorder %v915, 0
        %vm924 = vcmp.ne.s32.totalorder %v916, 0
        %vm925 = vcmp.ne.s32.totalorder %v917, 0
        %v926 = vsel %vm918, %v856, -inf
        %v927 = vsel %vm919, %v857, -inf
        %v928 = vsel %vm920, %v858, -inf
        %v929 = vsel %vm921, %v859, -inf
        %v930 = vsel %vm922, %v860, -inf
        %v931 = vsel %vm923, %v861, -inf
        %v932 = vsel %vm924, %v862, -inf
        %v933 = vsel %vm925, %v863, -inf
        %v934 = vpack.c.bf16 %v926, %v926
        %v935 = vpack.c.bf16 %v927, %v927
        %v936 = vpack.c.bf16 %v928, %v928
        %v937 = vpack.c.bf16 %v929, %v929
        %v938 = vpack.c.bf16 %v930, %v930
        %v939 = vpack.c.bf16 %v931, %v931
        %v940 = vpack.c.bf16 %v932, %v932
        %v941 = vpack.c.bf16 %v933, %v933
        %942 = vst [vmem:[%s390] sm:$0xf] %v934
        %943 = vst [vmem:[%s390 + $0x4] sm:$0xf] %v935
        %944 = vst [vmem:[%s390 + $0x8] sm:$0xf] %v936
        %945 = vst [vmem:[%s390 + $0xc] sm:$0xf] %v937
        %946 = vst [vmem:[%s390 + $0x10] sm:$0xf] %v938
        %947 = vst [vmem:[%s390 + $0x14] sm:$0xf] %v939
        %948 = vst [vmem:[%s390 + $0x18] sm:$0xf] %v940
        %949 = vst [vmem:[%s390 + $0x1c] sm:$0xf] %v941
        %s950 = sand.u32 %s245, 1
        %s951 = scalar_lea.sflag [#allocation3], %s950
        %s952 = sand.u32 %s245, 1
        %s953 = smul.addr %s952, 32
        %s954 = scalar_lea.vmem [#allocation2], %s953
        // Predicated region
        $region57: #{tpu_custom_call.1} parent=55 // pred_check
          %p955 = pneg %p255
        $region58: #{tpu_custom_call.1} parent=55 // pred_check_branch
          %957 = sbr.rel (%p955) target = $region60
        $region59: #{tpu_custom_call.1} parent=55 // pred_region
          %s958 = smul.u32 8, %s23
          %960 = vsyncadd %s951, 0
          %s961 = smul.addr %s958, 4
          %s962 = scalar_lea.hbm %s9, %s961
          %s963 = sshll.u32 %s954, 4
          %s964 = int_to_ptr.vmem [resolvable:$true] %s963
          %s965 = sshll.u32 %s962, 4
          %s966 = int_to_ptr.hbm [resolvable:$true] %s965
          %971 = dma.vmem_to_hbm [thread:$0]  %s964, 512, %s966, %s951, 64, 64, 4
        $region60: #{tpu_custom_call.1} parent=55 // pred_fallthru
          _
      $region56: #{tpu_custom_call.1} parent=5 // pred_fallthru
        _
      %p972 = scmp.le.s32.totalorder 2, %s18
      // Predicated region
      $region61: #{tpu_custom_call.1} parent=5 // pred_check
        %p973 = pneg %p972
      $region62: #{tpu_custom_call.1} parent=5 // pred_check_branch
        %975 = sbr.rel (%p973) target = $region64
      $region63: #{tpu_custom_call.1} parent=5 // pred_region
        %s976 = ssub.s32 %s18, 2
        // Predicated region
        $region65: #{tpu_custom_call.1} parent=63 // pred_check
          %p977 = pneg %p261
        $region66: #{tpu_custom_call.1} parent=63 // pred_check_branch
          %979 = sbr.rel (%p977) target = $region68
        $region67: #{tpu_custom_call.1} parent=63 // pred_region
          %s980 = sand.u32 %s246, 1
          %s981 = scalar_lea.sflag [#allocation3], %s980
          %s982 = sand.u32 %s246, 1
          %s983 = smul.addr %s982, 32
          %s984 = scalar_lea.vmem [#allocation2], %s983
          %986 = dma.done %s981, 512
        $region68: #{tpu_custom_call.1} parent=63 // pred_fallthru
          _
      $region64: #{tpu_custom_call.1} parent=5 // pred_fallthru
        _
    $region6: #{tpu_custom_call.1} parent=1 // loop_footer
      %s22 = sadd.s32 1, %s18
    $region7: #{tpu_custom_call.1} parent=1 // loop_footer_branch
      %17 = sbr.rel target = $region3
    $region8: #{tpu_custom_call.1} parent=1 // loop_exit
      _
    %987 = vsyncpa [#allocation3], 1
    %s988 = scalar_lea.sflag [#allocation3], 1
    %989 = vsyncpa %s988, 1

</llo_original>
